<compile_context>
chip_gen: v7x
topology: tpu7x:2x2x1
jax: 0.10.0
libtpu: 0.0.40
codegen_flags: <defaults>
</compile_context>

<pallas_src>
import jax
import jax.numpy as jnp
from jax.experimental import pallas as pl
from jax.experimental.pallas import tpu as pltpu


def _mlp_kernel(x_ref, w1_ref, b1_ref, w2_ref, b2_ref, w3_ref, b3_ref, o_ref):
    # x arrives from HBM as f32 (single HBM pass); cast to bf16 on the VPU
    # just before the MXU.  All dots accumulate in f32; bias/ReLU/sigmoid stay
    # in f32 (v5e's VPU/EUP have no bf16 path).
    x = x_ref[...].astype(jnp.bfloat16)

    # Layer 1: Linear + ReLU.
    h1 = jnp.dot(x, w1_ref[...], preferred_element_type=jnp.float32)
    h1 = jnp.maximum(h1 + b1_ref[...], 0.0)

    # Layer 2: Linear + ReLU.
    h2 = jnp.dot(h1.astype(jnp.bfloat16), w2_ref[...],
                 preferred_element_type=jnp.float32)
    h2 = jnp.maximum(h2 + b2_ref[...], 0.0)

    # Layer 3: 1-output Linear computed as (1,q2) x (bt,q2) contracted on q2
    # -> (1, bt).  Batch lands on the LANE axis so the output store is a
    # full-width (lane-dense) vst instead of a 1/128-utilized masked store.
    # bf16 operands, f32 accumulation.
    z = jax.lax.dot_general(
        w3_ref[...], h2.astype(jnp.bfloat16),
        dimension_numbers=(((1,), (1,)), ((), ())),
        preferred_element_type=jnp.float32)            # [1, batch_tile]
    z = z + b3_ref[0, 0]                               # scalar bias from SMEM

    o_ref[...] = jax.nn.sigmoid(z).astype(o_ref.dtype)


def neuralnet_forward(x, params, *, batch_tile=4096):
    """x: [N, d] float32. params: dict of w1,b1,w2,b2,w3,b3 ([in,out] layout)."""
    N, d = x.shape
    q1 = params["w1"].shape[1]
    q2 = params["w2"].shape[1]

    # Batch tile: multiple of 128 (lane width / (8,128) / bf16 packing), big
    # enough to amortize per-grid-step overhead, but capped so the grid has at
    # least 2 steps whenever N allows (v7x has 2 TensorCores sharing the
    # "parallel" grid axis; grid=1 idles one TC and kills DMA/compute overlap).
    assert batch_tile % 128 == 0, "batch_tile must be a multiple of 128"
    cap_for_grid2 = max(128, ((N // 2) // 128) * 128)
    bt = min(batch_tile, cap_for_grid2)

    # Pad the batch so the grid divides it evenly; padded rows are sliced off.
    n_pad = pl.cdiv(N, bt) * bt
    if n_pad != N:
        x = jnp.pad(x, ((0, n_pad - N), (0, 0)))
    grid_n = n_pad // bt

    # Weights are tiny and reused every step -> cast once to bf16 here.
    # x is NOT cast here (see kernel) to avoid an extra HBM pass.
    # NOTE: for non-toy models, pad q1/q2 to multiples of 128 once at init.
    w1 = params["w1"].astype(jnp.bfloat16)
    w2 = params["w2"].astype(jnp.bfloat16)
    w3 = params["w3"].reshape(1, q2).astype(jnp.bfloat16)  # [q2,1] -> row [1,q2]
    b1 = params["b1"].astype(jnp.float32)
    b2 = params["b2"].astype(jnp.float32)
    b3 = params["b3"].reshape(1, 1).astype(jnp.float32)

    cost = pl.CostEstimate(
        flops=2 * n_pad * (d * q1 + q1 * q2 + q2),
        transcendentals=n_pad,  # sigmoid
        bytes_accessed=(x.size * 4                       # f32 x stream
                        + (w1.size + w2.size + w3.size) * 2
                        + (b1.size + b2.size + b3.size) * 4
                        + n_pad * 4),                    # f32 output
    )

    in_specs = [
        # x: tiled over the batch (double-buffered by the BlockSpec pipeline).
        pl.BlockSpec((bt, d), lambda i: (i, 0)),
        # Weights / biases: constant block index -> DMA'd once, kept resident.
        pl.BlockSpec((d, q1), lambda i: (0, 0)),
        pl.BlockSpec((1, q1), lambda i: (0, 0)),
        pl.BlockSpec((q1, q2), lambda i: (0, 0)),
        pl.BlockSpec((1, q2), lambda i: (0, 0)),
        pl.BlockSpec((1, q2), lambda i: (0, 0)),
        # b3 is a single scalar -> SMEM.
        pl.BlockSpec(memory_space=pltpu.MemorySpace.SMEM),
    ]
    # Lane-dense single-row output: block (1, bt), sublane dim == full array dim.
    out_spec = pl.BlockSpec((1, bt), lambda i: (0, i))

    out = pl.pallas_call(
        _mlp_kernel,
        out_shape=jax.ShapeDtypeStruct((1, n_pad), jnp.float32),
        grid_spec=pltpu.PrefetchScalarGridSpec(
            num_scalar_prefetch=0,
            grid=(grid_n,),
            in_specs=in_specs,
            out_specs=out_spec,
        ),
        compiler_params=pltpu.CompilerParams(
            dimension_semantics=("parallel",),
            # > v5e's 16 MiB scoped default, < v7x's 64 MiB physical VMEM.
            vmem_limit_bytes=48 * 1024 * 1024,
        ),
        cost_estimate=cost,
    )(x, w1, b1, w2, b2, w3, b3)

    # [1, n_pad] -> [N, 1]; column j of the row is batch row j (metadata-only).
    return out.reshape(-1, 1)[:N]


def init_params(key, d, q1, q2, dtype=jnp.float32):
    """Deterministic init matching nn.Linear shapes (stored as [in, out])."""
    ks = jax.random.split(key, 6)

    def lin(kw, kb, fan_in, fan_out):
        bound = 1.0 / jnp.sqrt(fan_in)
        w = jax.random.uniform(kw, (fan_in, fan_out), dtype, -bound, bound)
        b = jax.random.uniform(kb, (1, fan_out), dtype, -bound, bound)
        return w, b

    w1, b1 = lin(ks[0], ks[1], d, q1)
    w2, b2 = lin(ks[2], ks[3], q1, q2)
    w3, b3 = lin(ks[4], ks[5], q2, 1)
    return {"w1": w1, "b1": b1, "w2": w2, "b2": b2, "w3": w3, "b3": b3}


def _reference(x, p):
    h1 = jnp.maximum(x @ p["w1"] + p["b1"], 0.0)
    h2 = jnp.maximum(h1 @ p["w2"] + p["b2"], 0.0)
    return jax.nn.sigmoid(h2 @ p["w3"] + p["b3"])


if __name__ == "__main__":
    # Small shapes consistent with NeuralNet(d, q1, q2).  With N=512 the
    # grid-2 cap picks batch_tile=256 -> grid of 2 steps (exercises the
    # pipelined / megacore path).
    N, d, q1, q2 = 512, 32, 64, 32

    key = jax.random.PRNGKey(0)
    kx, kp = jax.random.split(key)
    x = jax.random.normal(kx, (N, d), dtype=jnp.float32)
    params = init_params(kp, d, q1, q2)

    out = neuralnet_forward(x, params)
    out = jax.block_until_ready(out)

    ref = _reference(x, params)
    assert out.shape == (N, 1)
    # Tolerance loosened vs. pure-f32 because matmul operands are bf16
    # (accumulation stays f32).
    assert jnp.allclose(out, ref, atol=2e-2, rtol=2e-2), (
        float(jnp.max(jnp.abs(out - ref))))

    print("KERNEL_OK")
</pallas_src>

<mosaic_0001>
module attributes {stable_mosaic.version = 11 : i64} {
  func.func @_mlp_kernel(%arg0: i32, %arg1: memref<256x32xf32, #tpu.memory_space<vmem>>, %arg2: memref<32x64xbf16, #tpu.memory_space<vmem>>, %arg3: memref<1x64xf32, #tpu.memory_space<vmem>>, %arg4: memref<64x32xbf16, #tpu.memory_space<vmem>>, %arg5: memref<1x32xf32, #tpu.memory_space<vmem>>, %arg6: memref<1x32xbf16, #tpu.memory_space<vmem>>, %arg7: memref<1x1xf32, #tpu.memory_space<smem>>, %arg8: memref<1x256xf32, #tpu.memory_space<vmem>>) attributes {dimension_semantics = [#tpu.dimension_semantics<parallel>], iteration_bounds = array<i64: 2>, scalar_prefetch = 0 : i64, scratch_operands = 0 : i64, tpu.core_type = #tpu.core_type<tc>, window_params = [{transform_indices = @transform_0, window_bounds = array<i64: 256, 32>}, {pipeline_mode = #tpu.pipeline_mode<synchronous>, transform_indices = @transform_1, window_bounds = array<i64: 32, 64>}, {pipeline_mode = #tpu.pipeline_mode<synchronous>, transform_indices = @transform_2, window_bounds = array<i64: 1, 64>}, {pipeline_mode = #tpu.pipeline_mode<synchronous>, transform_indices = @transform_3, window_bounds = array<i64: 64, 32>}, {pipeline_mode = #tpu.pipeline_mode<synchronous>, transform_indices = @transform_4, window_bounds = array<i64: 1, 32>}, {pipeline_mode = #tpu.pipeline_mode<synchronous>, transform_indices = @transform_5, window_bounds = array<i64: 1, 32>}, {transform_indices = @transform_6, window_bounds = array<i64: 1, 1>}, {transform_indices = @transform_7, window_bounds = array<i64: 1, 256>}]} {
    %c0 = arith.constant 0 : index
    %c0_0 = arith.constant 0 : index
    %0 = vector.load %arg1[%c0, %c0_0] : memref<256x32xf32, #tpu.memory_space<vmem>>, vector<256x32xf32>
    %1 = arith.truncf %0 : vector<256x32xf32> to vector<256x32xbf16>
    %c0_1 = arith.constant 0 : index
    %c0_2 = arith.constant 0 : index
    %2 = vector.load %arg2[%c0_1, %c0_2] : memref<32x64xbf16, #tpu.memory_space<vmem>>, vector<32x64xbf16>
    %cst = arith.constant dense<0.000000e+00> : vector<256x64xf32>
    %3 = tpu.matmul %1, %2, %cst {dimension_numbers = #tpu.dot_dimension_numbers<[1], [0], [0], [1], [0, 0, 1, 1], [], []>} : vector<256x32xbf16>, vector<32x64xbf16>, vector<256x64xf32> -> vector<256x64xf32>
    %c0_3 = arith.constant 0 : index
    %c0_4 = arith.constant 0 : index
    %4 = vector.load %arg3[%c0_3, %c0_4] : memref<1x64xf32, #tpu.memory_space<vmem>>, vector<1x64xf32>
    %5 = vector.broadcast %4 : vector<1x64xf32> to vector<256x64xf32>
    %6 = arith.addf %3, %5 : vector<256x64xf32>
    %cst_5 = arith.constant 0.000000e+00 : f32
    %7 = vector.broadcast %cst_5 : f32 to vector<256x64xf32>
    %8 = arith.maximumf %6, %7 : vector<256x64xf32>
    %9 = arith.truncf %8 : vector<256x64xf32> to vector<256x64xbf16>
    %c0_6 = arith.constant 0 : index
    %c0_7 = arith.constant 0 : index
    %10 = vector.load %arg4[%c0_6, %c0_7] : memref<64x32xbf16, #tpu.memory_space<vmem>>, vector<64x32xbf16>
    %cst_8 = arith.constant dense<0.000000e+00> : vector<256x32xf32>
    %11 = tpu.matmul %9, %10, %cst_8 {dimension_numbers = #tpu.dot_dimension_numbers<[1], [0], [0], [1], [0, 0, 1, 1], [], []>} : vector<256x64xbf16>, vector<64x32xbf16>, vector<256x32xf32> -> vector<256x32xf32>
    %c0_9 = arith.constant 0 : index
    %c0_10 = arith.constant 0 : index
    %12 = vector.load %arg5[%c0_9, %c0_10] : memref<1x32xf32, #tpu.memory_space<vmem>>, vector<1x32xf32>
    %13 = vector.broadcast %12 : vector<1x32xf32> to vector<256x32xf32>
    %14 = arith.addf %11, %13 : vector<256x32xf32>
    %cst_11 = arith.constant 0.000000e+00 : f32
    %15 = vector.broadcast %cst_11 : f32 to vector<256x32xf32>
    %16 = arith.maximumf %14, %15 : vector<256x32xf32>
    %c0_12 = arith.constant 0 : index
    %c0_13 = arith.constant 0 : index
    %17 = vector.load %arg6[%c0_12, %c0_13] : memref<1x32xbf16, #tpu.memory_space<vmem>>, vector<1x32xbf16>
    %18 = arith.truncf %16 : vector<256x32xf32> to vector<256x32xbf16>
    %cst_14 = arith.constant dense<0.000000e+00> : vector<1x256xf32>
    %19 = tpu.matmul %17, %18, %cst_14 {dimension_numbers = #tpu.dot_dimension_numbers<[1], [1], [0], [0], [0, 0, 1, 0], [], []>} : vector<1x32xbf16>, vector<256x32xbf16>, vector<1x256xf32> -> vector<1x256xf32>
    %c0_15 = arith.constant 0 : index
    %c0_16 = arith.constant 0 : index
    %20 = memref.load %arg7[%c0_15, %c0_16] : memref<1x1xf32, #tpu.memory_space<smem>>
    %21 = vector.broadcast %20 : f32 to vector<1x256xf32>
    %22 = arith.addf %19, %21 : vector<1x256xf32>
    %23 = arith.negf %22 : vector<1x256xf32>
    %24 = math.exp %23 : vector<1x256xf32>
    %cst_17 = arith.constant 1.000000e+00 : f32
    %25 = vector.broadcast %cst_17 : f32 to vector<1x256xf32>
    %26 = arith.addf %25, %24 : vector<1x256xf32>
    %27 = arith.divf %25, %26 : vector<1x256xf32>
    %c0_18 = arith.constant 0 : index
    %c0_19 = arith.constant 0 : index
    %28 = vector.load %arg8[%c0_18, %c0_19] : memref<1x256xf32, #tpu.memory_space<vmem>>, vector<1x256xf32>
    tpu.vector_store %arg8[%c0_18, %c0_19], %27 {strides = array<i32>} : memref<1x256xf32, #tpu.memory_space<vmem>>, vector<1x256xf32>,
    return
  }
  func.func @transform_0(%arg0: i32) -> (i32, i32) {
    %c0_i32 = arith.constant 0 : i32
    %c0_i32_0 = arith.constant 0 : i32
    return %arg0, %c0_i32 : i32, i32
  }
  func.func @transform_1(%arg0: i32) -> (i32, i32) {
    %c0_i32 = arith.constant 0 : i32
    %c0_i32_0 = arith.constant 0 : i32
    %c0_i32_1 = arith.constant 0 : i32
    return %c0_i32, %c0_i32_0 : i32, i32
  }
  func.func @transform_2(%arg0: i32) -> (i32, i32) {
    %c0_i32 = arith.constant 0 : i32
    %c0_i32_0 = arith.constant 0 : i32
    %c0_i32_1 = arith.constant 0 : i32
    return %c0_i32, %c0_i32_0 : i32, i32
  }
  func.func @transform_3(%arg0: i32) -> (i32, i32) {
    %c0_i32 = arith.constant 0 : i32
    %c0_i32_0 = arith.constant 0 : i32
    %c0_i32_1 = arith.constant 0 : i32
    return %c0_i32, %c0_i32_0 : i32, i32
  }
  func.func @transform_4(%arg0: i32) -> (i32, i32) {
    %c0_i32 = arith.constant 0 : i32
    %c0_i32_0 = arith.constant 0 : i32
    %c0_i32_1 = arith.constant 0 : i32
    return %c0_i32, %c0_i32_0 : i32, i32
  }
  func.func @transform_5(%arg0: i32) -> (i32, i32) {
    %c0_i32 = arith.constant 0 : i32
    %c0_i32_0 = arith.constant 0 : i32
    %c0_i32_1 = arith.constant 0 : i32
    return %c0_i32, %c0_i32_0 : i32, i32
  }
  func.func @transform_6(%arg0: i32) -> (i32, i32) {
    %c0_i32 = arith.constant 0 : i32
    %c0_i32_0 = arith.constant 0 : i32
    %c0_i32_1 = arith.constant 0 : i32
    return %c0_i32, %c0_i32_0 : i32, i32
  }
  func.func @transform_7(%arg0: i32) -> (i32, i32) {
    %c0_i32 = arith.constant 0 : i32
    %c0_i32_0 = arith.constant 0 : i32
    return %c0_i32, %arg0 : i32, i32
  }
}

</mosaic_0001>

<llo_original>
// kernel: tpu_custom_call.1
$region0: #{tpu_custom_call.1}
  #allocation0 [shape = 'u32[]', space=smem, size = 0x4, offset = 0x4, fixed_abs, tag = 'smem constant byte address 0x4 - core index']
  #allocation1 [shape = 'u32[144,128]{1,0:T(1,128)}', space=vmem, size = 0x12000, scoped, tag = 'internal scratch']
  #allocation2 [shape = 'f32[1,1]{1,0:T(1,128)S(6)}', space=smem, size = 0x200, scoped, tag = 'scoped memory for tpu_custom_call.1']
  %s0 = inlined_call_operand.vmem [shape: f32[512,32], index: 0, kind: input, shape index: {}]
  %s1 = inlined_call_operand.vmem [shape: bf16[32,64], index: 1, kind: input, shape index: {}]
  %s2 = inlined_call_operand.vmem [shape: f32[1,64], index: 2, kind: input, shape index: {}]
  %s3 = inlined_call_operand.vmem [shape: bf16[64,32], index: 3, kind: input, shape index: {}]
  %s4 = inlined_call_operand.vmem [shape: f32[1,32], index: 4, kind: input, shape index: {}]
  %s5 = inlined_call_operand.vmem [shape: bf16[1,32], index: 5, kind: input, shape index: {}]
  %s6 = inlined_call_operand.<no memory space> [shape: f32[1,1], index: 6, kind: input, shape index: {}]
  %s7 = inlined_call_operand.hbm [shape: f32[1,512], index: 7, kind: output, shape index: {}]
  %s8 = sld [smem:[#allocation0]]
  $region61: #{tpu_custom_call.1} parent=0
    _
  %s10 = ssub.s32 1, %s8
  %s11 = scalar_select 0, %s10, %s8
  %12 = sst [smem:[#allocation2]] %s6
  $region1: #{tpu_custom_call.1} parent=0
    #allocation3 [shape = 'u8[2048]{0}', space=vmem, size = 0x800, scoped, tag = 'output window, operand 0']
    #allocation4 [shape = 's32[2]{0}', space=sflag, size = 0x8, scoped, tag = 'scoped memory for tpu_custom_call.1']
    %13 = vsyncpa [#allocation4], 0
    %s14 = scalar_lea.sflag [#allocation4], 1
    %15 = vsyncpa %s14, 0
    loop: start=0, step=1, limit=4
    $region2: #{tpu_custom_call.1} parent=1 // loop_pre_header
      _
    $region3: #{tpu_custom_call.1} parent=1 // loop_header
      %s17 = sphi 0, %s21
      %p18 = scmp.ge.s32.totalorder %s17, 4
      %s27 = sphi 0, %s29
      %s30 = sphi 0, %s27
      %s31 = sphi 0, %s30
      %s47 = sphi 0, %s31
      %s51 = sphi 0, %s51
      %s53 = sphi 0, %s51
      %s54 = sphi 0, %s53
      %s68 = sphi 0, %s54
      %s72 = sphi 0, %s72
      %s74 = sphi 0, %s72
      %s75 = sphi 0, %s74
      %s89 = sphi 0, %s75
      %s93 = sphi 0, %s93
      %s95 = sphi 0, %s93
      %s96 = sphi 0, %s95
      %s110 = sphi 0, %s96
      %s114 = sphi 0, %s114
      %s116 = sphi 0, %s114
      %s117 = sphi 0, %s116
      %s131 = sphi 0, %s117
      %s135 = sphi 0, %s135
      %s137 = sphi 0, %s135
      %s138 = sphi 0, %s137
      %s152 = sphi 0, %s138
      %s156 = sphi 0, %s156
      %s158 = sphi 0, %s156
      %s159 = sphi 0, %s158
      %s173 = sphi 0, %s159
      %s179 = sphi 0, %s181
      %s182 = sphi 0, %s179
      %s183 = sphi 0, %s182
      %s199 = sphi 0, %s183
    $region4: #{tpu_custom_call.1} parent=1 // loop_header_branch
      %20 = sbr.rel (%p18) target = $region8
    $region5: #{tpu_custom_call.1} parent=1 // loop_body
      %s22 = ssub.s32 %s17, 1
      %s23 = ssub.s32 %s17, 2
      %s24 = sadd.s32 %s17, 1
      %s25 = ssub.s32 %s17, %s24
      %p26 = scmp.eq.s32.totalorder %s25, 0
      %s28 = sadd.s32 %s27, 1
      %s29 = scalar_select %p26, %s27, %s28
      %p32 = pneg %p26
      %p33 = scmp.eq.s32.totalorder %s17, 1
      %p34 = por %p32, %p33
      %p35 = scmp.ne.s32.totalorder %s27, %s30
      %p36 = scmp.eq.s32.totalorder %s17, 0
      %p37 = por %p35, %p36
      %p38 = scmp.ne.s32.totalorder %s27, %s30
      %p39 = scmp.eq.s32.totalorder %s22, 1
      %p40 = por %p38, %p39
      %p41 = scmp.ne.s32.totalorder %s30, %s31
      %p42 = scmp.eq.s32.totalorder %s22, 0
      %p43 = por %p41, %p42
      %p44 = scmp.ne.s32.totalorder %s30, %s31
      %p45 = scmp.eq.s32.totalorder %s23, 1
      %p46 = por %p44, %p45
      %p48 = scmp.ne.s32.totalorder %s31, %s47
      %p49 = scmp.eq.s32.totalorder %s23, 0
      %p50 = por %p48, %p49
      %s52 = sadd.s32 %s51, 1
      %p55 = scmp.eq.s32.totalorder %s17, 1
      %p56 = scmp.ne.s32.totalorder %s51, %s53
      %p57 = scmp.eq.s32.totalorder %s17, 0
      %p58 = por %p56, %p57
      %p59 = scmp.ne.s32.totalorder %s51, %s53
      %p60 = scmp.eq.s32.totalorder %s22, 1
      %p61 = por %p59, %p60
      %p62 = scmp.ne.s32.totalorder %s53, %s54
      %p63 = scmp.eq.s32.totalorder %s22, 0
      %p64 = por %p62, %p63
      %p65 = scmp.ne.s32.totalorder %s53, %s54
      %p66 = scmp.eq.s32.totalorder %s23, 1
      %p67 = por %p65, %p66
      %p69 = scmp.ne.s32.totalorder %s54, %s68
      %p70 = scmp.eq.s32.totalorder %s23, 0
      %p71 = por %p69, %p70
      %s73 = sadd.s32 %s72, 1
      %p76 = scmp.eq.s32.totalorder %s17, 1
      %p77 = scmp.ne.s32.totalorder %s72, %s74
      %p78 = scmp.eq.s32.totalorder %s17, 0
      %p79 = por %p77, %p78
      %p80 = scmp.ne.s32.totalorder %s72, %s74
      %p81 = scmp.eq.s32.totalorder %s22, 1
      %p82 = por %p80, %p81
      %p83 = scmp.ne.s32.totalorder %s74, %s75
      %p84 = scmp.eq.s32.totalorder %s22, 0
      %p85 = por %p83, %p84
      %p86 = scmp.ne.s32.totalorder %s74, %s75
      %p87 = scmp.eq.s32.totalorder %s23, 1
      %p88 = por %p86, %p87
      %p90 = scmp.ne.s32.totalorder %s75, %s89
      %p91 = scmp.eq.s32.totalorder %s23, 0
      %p92 = por %p90, %p91
      %s94 = sadd.s32 %s93, 1
      %p97 = scmp.eq.s32.totalorder %s17, 1
      %p98 = scmp.ne.s32.totalorder %s93, %s95
      %p99 = scmp.eq.s32.totalorder %s17, 0
      %p100 = por %p98, %p99
      %p101 = scmp.ne.s32.totalorder %s93, %s95
      %p102 = scmp.eq.s32.totalorder %s22, 1
      %p103 = por %p101, %p102
      %p104 = scmp.ne.s32.totalorder %s95, %s96
      %p105 = scmp.eq.s32.totalorder %s22, 0
      %p106 = por %p104, %p105
      %p107 = scmp.ne.s32.totalorder %s95, %s96
      %p108 = scmp.eq.s32.totalorder %s23, 1
      %p109 = por %p107, %p108
      %p111 = scmp.ne.s32.totalorder %s96, %s110
      %p112 = scmp.eq.s32.totalorder %s23, 0
      %p113 = por %p111, %p112
      %s115 = sadd.s32 %s114, 1
      %p118 = scmp.eq.s32.totalorder %s17, 1
      %p119 = scmp.ne.s32.totalorder %s114, %s116
      %p120 = scmp.eq.s32.totalorder %s17, 0
      %p121 = por %p119, %p120
      %p122 = scmp.ne.s32.totalorder %s114, %s116
      %p123 = scmp.eq.s32.totalorder %s22, 1
      %p124 = por %p122, %p123
      %p125 = scmp.ne.s32.totalorder %s116, %s117
      %p126 = scmp.eq.s32.totalorder %s22, 0
      %p127 = por %p125, %p126
      %p128 = scmp.ne.s32.totalorder %s116, %s117
      %p129 = scmp.eq.s32.totalorder %s23, 1
      %p130 = por %p128, %p129
      %p132 = scmp.ne.s32.totalorder %s117, %s131
      %p133 = scmp.eq.s32.totalorder %s23, 0
      %p134 = por %p132, %p133
      %s136 = sadd.s32 %s135, 1
      %p139 = scmp.eq.s32.totalorder %s17, 1
      %p140 = scmp.ne.s32.totalorder %s135, %s137
      %p141 = scmp.eq.s32.totalorder %s17, 0
      %p142 = por %p140, %p141
      %p143 = scmp.ne.s32.totalorder %s135, %s137
      %p144 = scmp.eq.s32.totalorder %s22, 1
      %p145 = por %p143, %p144
      %p146 = scmp.ne.s32.totalorder %s137, %s138
      %p147 = scmp.eq.s32.totalorder %s22, 0
      %p148 = por %p146, %p147
      %p149 = scmp.ne.s32.totalorder %s137, %s138
      %p150 = scmp.eq.s32.totalorder %s23, 1
      %p151 = por %p149, %p150
      %p153 = scmp.ne.s32.totalorder %s138, %s152
      %p154 = scmp.eq.s32.totalorder %s23, 0
      %p155 = por %p153, %p154
      %s157 = sadd.s32 %s156, 1
      %p160 = scmp.eq.s32.totalorder %s17, 1
      %p161 = scmp.ne.s32.totalorder %s156, %s158
      %p162 = scmp.eq.s32.totalorder %s17, 0
      %p163 = por %p161, %p162
      %p164 = scmp.ne.s32.totalorder %s156, %s158
      %p165 = scmp.eq.s32.totalorder %s22, 1
      %p166 = por %p164, %p165
      %p167 = scmp.ne.s32.totalorder %s158, %s159
      %p168 = scmp.eq.s32.totalorder %s22, 0
      %p169 = por %p167, %p168
      %p170 = scmp.ne.s32.totalorder %s158, %s159
      %p171 = scmp.eq.s32.totalorder %s23, 1
      %p172 = por %p170, %p171
      %p174 = scmp.ne.s32.totalorder %s159, %s173
      %p175 = scmp.eq.s32.totalorder %s23, 0
      %p176 = por %p174, %p175
      %s177 = ssub.s32 %s17, %s24
      %p178 = scmp.eq.s32.totalorder %s177, 0
      %s180 = sadd.s32 %s179, 1
      %s181 = scalar_select %p178, %s179, %s180
      %p184 = pneg %p178
      %p185 = scmp.eq.s32.totalorder %s17, 1
      %p186 = por %p184, %p185
      %p187 = scmp.ne.s32.totalorder %s179, %s182
      %p188 = scmp.eq.s32.totalorder %s17, 0
      %p189 = por %p187, %p188
      %p190 = scmp.ne.s32.totalorder %s179, %s182
      %p191 = scmp.eq.s32.totalorder %s22, 1
      %p192 = por %p190, %p191
      %p193 = scmp.ne.s32.totalorder %s182, %s183
      %p194 = scmp.eq.s32.totalorder %s22, 0
      %p195 = por %p193, %p194
      %p196 = scmp.ne.s32.totalorder %s182, %s183
      %p197 = scmp.eq.s32.totalorder %s23, 1
      %p198 = por %p196, %p197
      %p200 = scmp.ne.s32.totalorder %s183, %s199
      %p201 = scmp.eq.s32.totalorder %s23, 0
      %p202 = por %p200, %p201
      %p203 = scmp.le.s32.totalorder 1, %s17
      %p204 = scmp.lt.s32.totalorder %s17, 3
      %p205 = pnand %p203, %p204
      %p206 = pneg %p205
      // Predicated region
      $region9: #{tpu_custom_call.1} parent=5 // pred_check
        _
      $region10: #{tpu_custom_call.1} parent=5 // pred_check_branch
        %208 = sbr.rel (%p205) target = $region12
      $region11: #{tpu_custom_call.1} parent=5 // pred_region
        %s209 = ssub.s32 %s17, 1
        // Predicated region
        $region13: #{tpu_custom_call.1} parent=11 // pred_check
          %p210 = pneg %p64
        $region14: #{tpu_custom_call.1} parent=11 // pred_check_branch
          %212 = sbr.rel (%p210) target = $region16
        $region15: #{tpu_custom_call.1} parent=11 // pred_region
          _
        $region16: #{tpu_custom_call.1} parent=11 // pred_fallthru
          _
        // Predicated region
        $region17: #{tpu_custom_call.1} parent=11 // pred_check
          %p213 = pneg %p85
        $region18: #{tpu_custom_call.1} parent=11 // pred_check_branch
          %215 = sbr.rel (%p213) target = $region20
        $region19: #{tpu_custom_call.1} parent=11 // pred_region
          _
        $region20: #{tpu_custom_call.1} parent=11 // pred_fallthru
          _
        // Predicated region
        $region21: #{tpu_custom_call.1} parent=11 // pred_check
          %p216 = pneg %p106
        $region22: #{tpu_custom_call.1} parent=11 // pred_check_branch
          %218 = sbr.rel (%p216) target = $region24
        $region23: #{tpu_custom_call.1} parent=11 // pred_region
          _
        $region24: #{tpu_custom_call.1} parent=11 // pred_fallthru
          _
        // Predicated region
        $region25: #{tpu_custom_call.1} parent=11 // pred_check
          %p219 = pneg %p127
        $region26: #{tpu_custom_call.1} parent=11 // pred_check_branch
          %221 = sbr.rel (%p219) target = $region28
        $region27: #{tpu_custom_call.1} parent=11 // pred_region
          _
        $region28: #{tpu_custom_call.1} parent=11 // pred_fallthru
          _
        // Predicated region
        $region29: #{tpu_custom_call.1} parent=11 // pred_check
          %p222 = pneg %p148
        $region30: #{tpu_custom_call.1} parent=11 // pred_check_branch
          %224 = sbr.rel (%p222) target = $region32
        $region31: #{tpu_custom_call.1} parent=11 // pred_region
          _
        $region32: #{tpu_custom_call.1} parent=11 // pred_fallthru
          _
        // Predicated region
        $region33: #{tpu_custom_call.1} parent=11 // pred_check
          %p225 = pneg %p169
        $region34: #{tpu_custom_call.1} parent=11 // pred_check_branch
          %227 = sbr.rel (%p225) target = $region36
        $region35: #{tpu_custom_call.1} parent=11 // pred_region
          _
        $region36: #{tpu_custom_call.1} parent=11 // pred_fallthru
          _
      $region12: #{tpu_custom_call.1} parent=5 // pred_fallthru
        _
      %p228 = scmp.lt.s32.totalorder %s17, 2
      // Predicated region
      $region37: #{tpu_custom_call.1} parent=5 // pred_check
        %p229 = pneg %p228
      $region38: #{tpu_custom_call.1} parent=5 // pred_check_branch
        %231 = sbr.rel (%p229) target = $region40
      $region39: #{tpu_custom_call.1} parent=5 // pred_region
        // Predicated region
        $region41: #{tpu_custom_call.1} parent=39 // pred_check
          %p232 = pneg %p37
        $region42: #{tpu_custom_call.1} parent=39 // pred_check_branch
          %234 = sbr.rel (%p232) target = $region44
        $region43: #{tpu_custom_call.1} parent=39 // pred_region
          %s235 = smul.u32 32, %s17
          %p236 = scmp.lt.s32.totalorder %s235, 63
          %s237 = scalar_select %p236, %s235, 63
          %s238 = smul.addr %s237, 8
          %s239 = scalar_lea.vmem %s0, %s238
          %s240 = smul.u32 32, %s17
        $region44: #{tpu_custom_call.1} parent=39 // pred_fallthru
          _
      $region40: #{tpu_custom_call.1} parent=5 // pred_fallthru
        _
      %p241 = scmp.le.s32.totalorder 1, %s17
      %p242 = scmp.lt.s32.totalorder %s17, 3
      %p243 = pnand %p241, %p242
      %p244 = pneg %p243
      // Predicated region
      $region45: #{tpu_custom_call.1} parent=5 // pred_check
        _
      $region46: #{tpu_custom_call.1} parent=5 // pred_check_branch
        %246 = sbr.rel (%p243) target = $region48
      $region47: #{tpu_custom_call.1} parent=5 // pred_region
        %s247 = ssub.s32 %s17, 1
        %s248 = smul.u32 32, %s22
        %p249 = scmp.lt.s32.totalorder %s248, 63
        %s250 = scalar_select %p249, %s248, 63
        %s251 = smul.addr %s250, 8
        %s252 = scalar_lea.vmem %s0, %s251
        %p253 = pneg %p43
        %p254 = pneg %p40
        %p255 = pneg %p64
        %p256 = pneg %p61
        %p257 = pneg %p85
        %p258 = pneg %p82
        %p259 = pneg %p106
        %p260 = pneg %p103
        %p261 = pneg %p127
        %p262 = pneg %p124
        %p263 = pneg %p148
        %p264 = pneg %p145
        %p265 = pneg %p169
        %p266 = pneg %p166
        %p267 = pneg %p195
        %p268 = pneg %p192
        %s269 = sand.u32 %s182, 1
        %s270 = scalar_lea.sflag [#allocation4], %s269
        %s271 = sand.u32 %s182, 1
        %s272 = smul.addr %s271, 2
        %s273 = scalar_lea.vmem [#allocation3], %s272
        %s274 = smul.u32 32, %s22
        %p275 = scmp.lt.s32.totalorder %s274, 63
        %s276 = scalar_select %p275, %s274, 63
        %s277 = smul.addr %s276, 8
        %s278 = scalar_lea.vmem %s0, %s277
        %s279 = smul.u32 32, %s22
        %s280 = smul.u32 2, %s22
        %v282 = vld [vmem:[%s278] sm:$0xff]
        %v283 = vld [vmem:[%s278 + $0x8] sm:$0xff]
        %v284 = vld [vmem:[%s278 + $0x10] sm:$0xff]
        %v285 = vld [vmem:[%s278 + $0x18] sm:$0xff]
        %v286 = vld [vmem:[%s278 + $0x20] sm:$0xff]
        %v287 = vld [vmem:[%s278 + $0x28] sm:$0xff]
        %v288 = vld [vmem:[%s278 + $0x30] sm:$0xff]
        %v289 = vld [vmem:[%s278 + $0x38] sm:$0xff]
        %v290 = vld [vmem:[%s278 + $0x40] sm:$0xff]
        %v291 = vld [vmem:[%s278 + $0x48] sm:$0xff]
        %v292 = vld [vmem:[%s278 + $0x50] sm:$0xff]
        %v293 = vld [vmem:[%s278 + $0x58] sm:$0xff]
        %v294 = vld [vmem:[%s278 + $0x60] sm:$0xff]
        %v295 = vld [vmem:[%s278 + $0x68] sm:$0xff]
        %v296 = vld [vmem:[%s278 + $0x70] sm:$0xff]
        %v297 = vld [vmem:[%s278 + $0x78] sm:$0xff]
        %v298 = vld [vmem:[%s278 + $0x80] sm:$0xff]
        %v299 = vld [vmem:[%s278 + $0x88] sm:$0xff]
        %v300 = vld [vmem:[%s278 + $0x90] sm:$0xff]
        %v301 = vld [vmem:[%s278 + $0x98] sm:$0xff]
        %v302 = vld [vmem:[%s278 + $0xa0] sm:$0xff]
        %v303 = vld [vmem:[%s278 + $0xa8] sm:$0xff]
        %v304 = vld [vmem:[%s278 + $0xb0] sm:$0xff]
        %v305 = vld [vmem:[%s278 + $0xb8] sm:$0xff]
        %v306 = vld [vmem:[%s278 + $0xc0] sm:$0xff]
        %v307 = vld [vmem:[%s278 + $0xc8] sm:$0xff]
        %v308 = vld [vmem:[%s278 + $0xd0] sm:$0xff]
        %v309 = vld [vmem:[%s278 + $0xd8] sm:$0xff]
        %v310 = vld [vmem:[%s278 + $0xe0] sm:$0xff]
        %v311 = vld [vmem:[%s278 + $0xe8] sm:$0xff]
        %v312 = vld [vmem:[%s278 + $0xf0] sm:$0xff]
        %v313 = vld [vmem:[%s278 + $0xf8] sm:$0xff]
        %v314 = vpack.c.bf16 %v283, %v282
        %v315 = vpack.c.bf16 %v285, %v284
        %v316 = vpack.c.bf16 %v287, %v286
        %v317 = vpack.c.bf16 %v289, %v288
        %v318 = vpack.c.bf16 %v291, %v290
        %v319 = vpack.c.bf16 %v293, %v292
        %v320 = vpack.c.bf16 %v295, %v294
        %v321 = vpack.c.bf16 %v297, %v296
        %v322 = vpack.c.bf16 %v299, %v298
        %v323 = vpack.c.bf16 %v301, %v300
        %v324 = vpack.c.bf16 %v303, %v302
        %v325 = vpack.c.bf16 %v305, %v304
        %v326 = vpack.c.bf16 %v307, %v306
        %v327 = vpack.c.bf16 %v309, %v308
        %v328 = vpack.c.bf16 %v311, %v310
        %v329 = vpack.c.bf16 %v313, %v312
        %v330 = vld [vmem:[%s1] sm:$0xf]
        %v331 = vld [vmem:[%s1 + $0x4] sm:$0xf]
        %v332 = vld [vmem:[%s1 + $0x8] sm:$0xf]
        %v333 = vld [vmem:[%s1 + $0xc] sm:$0xf]
        %v334 = vld [vmem:[%s2] sm:$0x1]
        %v336 = vlaneseq
        %v337 = vshrl.u32 %v336, 7
        %v338 = vsub.s32 0, %v337
        %v339 = vrot.slane %v334, %v338
        %v345 = vunpack.c.l.b16 %v330
        %v346 = vunpack.c.l.b16 %v331
        %v347 = vunpack.c.l.b16 %v332
        %v348 = vunpack.c.l.b16 %v333
        %v349 = vpack.c.b16 %v346, %v345
        %v350 = vpack.c.b16 %v348, %v347
        %vm353 = vcmask 261120
        %v355 = vsel %vm353, %v314, 0
        %v358 = vsel %vm353, %v315, 0
        %v361 = vsel %vm353, %v316, 0
        %v364 = vsel %vm353, %v317, 0
        %v367 = vsel %vm353, %v318, 0
        %v370 = vsel %vm353, %v319, 0
        %v373 = vsel %vm353, %v320, 0
        %v376 = vsel %vm353, %v321, 0
        %v379 = vsel %vm353, %v322, 0
        %v382 = vsel %vm353, %v323, 0
        %v385 = vsel %vm353, %v324, 0
        %v388 = vsel %vm353, %v325, 0
        %v391 = vsel %vm353, %v326, 0
        %v394 = vsel %vm353, %v327, 0
        %v397 = vsel %vm353, %v328, 0
        %v400 = vsel %vm353, %v329, 0
        %402 = vmatprep.subr.bf16.mxu0 0
        %403 = vmatpush1.bf16.msra.mxu0 %v349
        %404 = vmatprep.subr.bf16.mxu0 0
        %405 = vmatpush1.bf16.msra.mxu0 %v350
        %406 = vmatprep.subr.bf16.mxu0 0
        %407 = vmatpush1.bf16.msra.mxu0 0
        %408 = vmatprep.subr.bf16.mxu0 0
        %409 = vmatpush1.bf16.msra.mxu0 0
        %410 = vmatprep.subr.bf16.mxu0 0
        %411 = vmatpush1.bf16.msra.mxu0 0
        %412 = vmatprep.subr.bf16.mxu0 0
        %413 = vmatpush1.bf16.msra.mxu0 0
        %414 = vmatprep.subr.bf16.mxu0 0
        %415 = vmatpush1.bf16.msra.mxu0 0
        %416 = vmatprep.subr.bf16.mxu0 0
        %417 = vmatpush1.bf16.msra.mxu0 0
        %418 = vmatprep.subr.bf16.mxu0 0
        %419 = vmatpush1.bf16.msra.mxu0 0
        %420 = vmatprep.subr.bf16.mxu0 0
        %421 = vmatpush1.bf16.msra.mxu0 0
        %422 = vmatprep.subr.bf16.mxu0 0
        %423 = vmatpush1.bf16.msra.mxu0 0
        %424 = vmatprep.subr.bf16.mxu0 0
        %425 = vmatpush1.bf16.msra.mxu0 0
        %426 = vmatprep.subr.bf16.mxu0 0
        %427 = vmatpush1.bf16.msra.mxu0 0
        %428 = vmatprep.subr.bf16.mxu0 0
        %429 = vmatpush1.bf16.msra.mxu0 0
        %430 = vmatprep.subr.bf16.mxu0 0
        %431 = vmatpush1.bf16.msra.mxu0 0
        %432 = vmatprep.subr.bf16.mxu0 0
        %433 = vmatpush1.bf16.msra.mxu0 0
        %434 = vmatprep.mubr.bf16.mxu0 0
        %435 = vmatmul.mubr.bf16.gmra.mrb[0].mxu0 %v355
        %v436 = vpop.f32.mrb[0].mxu0
        %v437 = vadd.f32 %v339, %v436
        %v438 = vpop.f32.mrb[0].mxu0
        %v439 = vpop.f32.mrb[0].mxu0
        %v440 = vadd.f32 %v339, %v439
        %v441 = vpop.f32.mrb[0].mxu0
        %442 = vmatprep.mubr.bf16.mxu0 0
        %443 = vmatmul.mubr.bf16.gmra.mrb[0].mxu0 %v358
        %v444 = vpop.f32.mrb[0].mxu0
        %v445 = vadd.f32 %v339, %v444
        %v446 = vpop.f32.mrb[0].mxu0
        %v447 = vpop.f32.mrb[0].mxu0
        %v448 = vadd.f32 %v339, %v447
        %v449 = vpop.f32.mrb[0].mxu0
        %450 = vmatprep.mubr.bf16.mxu0 0
        %451 = vmatmul.mubr.bf16.gmra.mrb[0].mxu0 %v361
        %v452 = vpop.f32.mrb[0].mxu0
        %v453 = vadd.f32 %v339, %v452
        %v454 = vpop.f32.mrb[0].mxu0
        %v455 = vpop.f32.mrb[0].mxu0
        %v456 = vadd.f32 %v339, %v455
        %v457 = vpop.f32.mrb[0].mxu0
        %458 = vmatprep.mubr.bf16.mxu0 0
        %459 = vmatmul.mubr.bf16.gmra.mrb[0].mxu0 %v364
        %v460 = vpop.f32.mrb[0].mxu0
        %v461 = vadd.f32 %v339, %v460
        %v462 = vpop.f32.mrb[0].mxu0
        %v463 = vpop.f32.mrb[0].mxu0
        %v464 = vadd.f32 %v339, %v463
        %v465 = vpop.f32.mrb[0].mxu0
        %466 = vmatprep.mubr.bf16.mxu0 0
        %467 = vmatmul.mubr.bf16.gmra.mrb[0].mxu0 %v367
        %v468 = vpop.f32.mrb[0].mxu0
        %v469 = vadd.f32 %v339, %v468
        %v470 = vpop.f32.mrb[0].mxu0
        %v471 = vpop.f32.mrb[0].mxu0
        %v472 = vadd.f32 %v339, %v471
        %v473 = vpop.f32.mrb[0].mxu0
        %474 = vmatprep.mubr.bf16.mxu0 0
        %475 = vmatmul.mubr.bf16.gmra.mrb[0].mxu0 %v370
        %v476 = vpop.f32.mrb[0].mxu0
        %v477 = vadd.f32 %v339, %v476
        %v478 = vpop.f32.mrb[0].mxu0
        %v479 = vpop.f32.mrb[0].mxu0
        %v480 = vadd.f32 %v339, %v479
        %v481 = vpop.f32.mrb[0].mxu0
        %482 = vmatprep.mubr.bf16.mxu0 0
        %483 = vmatmul.mubr.bf16.gmra.mrb[0].mxu0 %v373
        %v484 = vpop.f32.mrb[0].mxu0
        %v485 = vadd.f32 %v339, %v484
        %v486 = vpop.f32.mrb[0].mxu0
        %v487 = vpop.f32.mrb[0].mxu0
        %v488 = vadd.f32 %v339, %v487
        %v489 = vpop.f32.mrb[0].mxu0
        %490 = vmatprep.mubr.bf16.mxu0 0
        %491 = vmatmul.mubr.bf16.gmra.mrb[0].mxu0 %v376
        %v492 = vpop.f32.mrb[0].mxu0
        %v493 = vadd.f32 %v339, %v492
        %v494 = vpop.f32.mrb[0].mxu0
        %v495 = vpop.f32.mrb[0].mxu0
        %v496 = vadd.f32 %v339, %v495
        %v497 = vpop.f32.mrb[0].mxu0
        %498 = vmatprep.mubr.bf16.mxu0 0
        %499 = vmatmul.mubr.bf16.gmra.mrb[0].mxu0 %v379
        %v500 = vpop.f32.mrb[0].mxu0
        %v501 = vadd.f32 %v339, %v500
        %v502 = vpop.f32.mrb[0].mxu0
        %v503 = vpop.f32.mrb[0].mxu0
        %v504 = vadd.f32 %v339, %v503
        %v505 = vpop.f32.mrb[0].mxu0
        %506 = vmatprep.mubr.bf16.mxu0 0
        %507 = vmatmul.mubr.bf16.gmra.mrb[0].mxu0 %v382
        %v508 = vpop.f32.mrb[0].mxu0
        %v509 = vadd.f32 %v339, %v508
        %v510 = vpop.f32.mrb[0].mxu0
        %v511 = vpop.f32.mrb[0].mxu0
        %v512 = vadd.f32 %v339, %v511
        %v513 = vpop.f32.mrb[0].mxu0
        %514 = vmatprep.mubr.bf16.mxu0 0
        %515 = vmatmul.mubr.bf16.gmra.mrb[0].mxu0 %v385
        %v516 = vpop.f32.mrb[0].mxu0
        %v517 = vadd.f32 %v339, %v516
        %v518 = vpop.f32.mrb[0].mxu0
        %v519 = vpop.f32.mrb[0].mxu0
        %v520 = vadd.f32 %v339, %v519
        %v521 = vpop.f32.mrb[0].mxu0
        %522 = vmatprep.mubr.bf16.mxu0 0
        %523 = vmatmul.mubr.bf16.gmra.mrb[0].mxu0 %v388
        %v524 = vpop.f32.mrb[0].mxu0
        %v525 = vadd.f32 %v339, %v524
        %v526 = vpop.f32.mrb[0].mxu0
        %v527 = vpop.f32.mrb[0].mxu0
        %v528 = vadd.f32 %v339, %v527
        %v529 = vpop.f32.mrb[0].mxu0
        %530 = vmatprep.mubr.bf16.mxu0 0
        %531 = vmatmul.mubr.bf16.gmra.mrb[0].mxu0 %v391
        %v532 = vpop.f32.mrb[0].mxu0
        %v533 = vadd.f32 %v339, %v532
        %v534 = vpop.f32.mrb[0].mxu0
        %v535 = vpop.f32.mrb[0].mxu0
        %v536 = vadd.f32 %v339, %v535
        %v537 = vpop.f32.mrb[0].mxu0
        %538 = vmatprep.mubr.bf16.mxu0 0
        %539 = vmatmul.mubr.bf16.gmra.mrb[0].mxu0 %v394
        %v540 = vpop.f32.mrb[0].mxu0
        %v541 = vadd.f32 %v339, %v540
        %v542 = vpop.f32.mrb[0].mxu0
        %v543 = vpop.f32.mrb[0].mxu0
        %v544 = vadd.f32 %v339, %v543
        %v545 = vpop.f32.mrb[0].mxu0
        %546 = vmatprep.mubr.bf16.mxu0 0
        %547 = vmatmul.mubr.bf16.gmra.mrb[0].mxu0 %v397
        %v548 = vpop.f32.mrb[0].mxu0
        %v549 = vadd.f32 %v339, %v548
        %v550 = vpop.f32.mrb[0].mxu0
        %v551 = vpop.f32.mrb[0].mxu0
        %v552 = vadd.f32 %v339, %v551
        %v553 = vpop.f32.mrb[0].mxu0
        %554 = vmatprep.mubr.bf16.mxu0 0
        %555 = vmatmul.mubr.bf16.gmra.mrb[0].mxu0 %v400
        %v556 = vpop.f32.mrb[0].mxu0
        %v557 = vadd.f32 %v339, %v556
        %v558 = vpop.f32.mrb[0].mxu0
        %v559 = vpop.f32.mrb[0].mxu0
        %v560 = vadd.f32 %v339, %v559
        %v561 = vpop.f32.mrb[0].mxu0
        %562 = vdwg.mxu0
        %v563 = vmax.f32 %v437, 0.0
        %v564 = vmax.f32 %v440, 0.0
        %v565 = vmax.f32 %v445, 0.0
        %v566 = vmax.f32 %v448, 0.0
        %v567 = vmax.f32 %v453, 0.0
        %v568 = vmax.f32 %v456, 0.0
        %v569 = vmax.f32 %v461, 0.0
        %v570 = vmax.f32 %v464, 0.0
        %v571 = vmax.f32 %v469, 0.0
        %v572 = vmax.f32 %v472, 0.0
        %v573 = vmax.f32 %v477, 0.0
        %v574 = vmax.f32 %v480, 0.0
        %v575 = vmax.f32 %v485, 0.0
        %v576 = vmax.f32 %v488, 0.0
        %v577 = vmax.f32 %v493, 0.0
        %v578 = vmax.f32 %v496, 0.0
        %v579 = vmax.f32 %v501, 0.0
        %v580 = vmax.f32 %v504, 0.0
        %v581 = vmax.f32 %v509, 0.0
        %v582 = vmax.f32 %v512, 0.0
        %v583 = vmax.f32 %v517, 0.0
        %v584 = vmax.f32 %v520, 0.0
        %v585 = vmax.f32 %v525, 0.0
        %v586 = vmax.f32 %v528, 0.0
        %v587 = vmax.f32 %v533, 0.0
        %v588 = vmax.f32 %v536, 0.0
        %v589 = vmax.f32 %v541, 0.0
        %v590 = vmax.f32 %v544, 0.0
        %v591 = vmax.f32 %v549, 0.0
        %v592 = vmax.f32 %v552, 0.0
        %v593 = vmax.f32 %v557, 0.0
        %v594 = vmax.f32 %v560, 0.0
        %v595 = vpack.c.bf16 %v564, %v563
        %v596 = vpack.c.bf16 %v566, %v565
        %v597 = vpack.c.bf16 %v568, %v567
        %v598 = vpack.c.bf16 %v570, %v569
        %v599 = vpack.c.bf16 %v572, %v571
        %v600 = vpack.c.bf16 %v574, %v573
        %v601 = vpack.c.bf16 %v576, %v575
        %v602 = vpack.c.bf16 %v578, %v577
        %v603 = vpack.c.bf16 %v580, %v579
        %v604 = vpack.c.bf16 %v582, %v581
        %v605 = vpack.c.bf16 %v584, %v583
        %v606 = vpack.c.bf16 %v586, %v585
        %v607 = vpack.c.bf16 %v588, %v587
        %v608 = vpack.c.bf16 %v590, %v589
        %v609 = vpack.c.bf16 %v592, %v591
        %v610 = vpack.c.bf16 %v594, %v593
        %v611 = vld [vmem:[%s3] sm:$0xf]
        %v612 = vld [vmem:[%s3 + $0x4] sm:$0xf]
        %v613 = vld [vmem:[%s3 + $0x8] sm:$0xf]
        %v614 = vld [vmem:[%s3 + $0xc] sm:$0xf]
        %v615 = vld [vmem:[%s3 + $0x10] sm:$0xf]
        %v616 = vld [vmem:[%s3 + $0x14] sm:$0xf]
        %v617 = vld [vmem:[%s3 + $0x18] sm:$0xf]
        %v618 = vld [vmem:[%s3 + $0x1c] sm:$0xf]
        %v619 = vld [vmem:[%s4] sm:$0x1]
        %v621 = vlaneseq
        %v622 = vshrl.u32 %v621, 7
        %v623 = vsub.s32 0, %v622
        %v624 = vrot.slane %v619, %v623
        %v634 = vunpack.c.l.b16 %v611
        %v635 = vunpack.c.l.b16 %v612
        %v636 = vunpack.c.l.b16 %v613
        %v637 = vunpack.c.l.b16 %v614
        %v638 = vunpack.c.l.b16 %v615
        %v639 = vunpack.c.l.b16 %v616
        %v640 = vunpack.c.l.b16 %v617
        %v641 = vunpack.c.l.b16 %v618
        %v642 = vpack.c.b16 %v635, %v634
        %v643 = vpack.c.b16 %v637, %v636
        %v644 = vpack.c.b16 %v639, %v638
        %v645 = vpack.c.b16 %v641, %v640
        %vm650 = vcmask 523264
        %v652 = vsel %vm650, %v595, 0
        %v655 = vsel %vm650, %v596, 0
        %v658 = vsel %vm650, %v597, 0
        %v661 = vsel %vm650, %v598, 0
        %v664 = vsel %vm650, %v599, 0
        %v667 = vsel %vm650, %v600, 0
        %v670 = vsel %vm650, %v601, 0
        %v673 = vsel %vm650, %v602, 0
        %v676 = vsel %vm650, %v603, 0
        %v679 = vsel %vm650, %v604, 0
        %v682 = vsel %vm650, %v605, 0
        %v685 = vsel %vm650, %v606, 0
        %v688 = vsel %vm650, %v607, 0
        %v691 = vsel %vm650, %v608, 0
        %v694 = vsel %vm650, %v609, 0
        %v697 = vsel %vm650, %v610, 0
        %699 = vmatprep.subr.bf16.mxu0 0
        %700 = vmatpush1.bf16.msra.mxu0 %v642
        %701 = vmatprep.subr.bf16.mxu0 0
        %702 = vmatpush1.bf16.msra.mxu0 %v643
        %703 = vmatprep.subr.bf16.mxu0 0
        %704 = vmatpush1.bf16.msra.mxu0 %v644
        %705 = vmatprep.subr.bf16.mxu0 0
        %706 = vmatpush1.bf16.msra.mxu0 %v645
        %707 = vmatprep.subr.bf16.mxu0 0
        %708 = vmatpush1.bf16.msra.mxu0 0
        %709 = vmatprep.subr.bf16.mxu0 0
        %710 = vmatpush1.bf16.msra.mxu0 0
        %711 = vmatprep.subr.bf16.mxu0 0
        %712 = vmatpush1.bf16.msra.mxu0 0
        %713 = vmatprep.subr.bf16.mxu0 0
        %714 = vmatpush1.bf16.msra.mxu0 0
        %715 = vmatprep.subr.bf16.mxu0 0
        %716 = vmatpush1.bf16.msra.mxu0 0
        %717 = vmatprep.subr.bf16.mxu0 0
        %718 = vmatpush1.bf16.msra.mxu0 0
        %719 = vmatprep.subr.bf16.mxu0 0
        %720 = vmatpush1.bf16.msra.mxu0 0
        %721 = vmatprep.subr.bf16.mxu0 0
        %722 = vmatpush1.bf16.msra.mxu0 0
        %723 = vmatprep.subr.bf16.mxu0 0
        %724 = vmatpush1.bf16.msra.mxu0 0
        %725 = vmatprep.subr.bf16.mxu0 0
        %726 = vmatpush1.bf16.msra.mxu0 0
        %727 = vmatprep.subr.bf16.mxu0 0
        %728 = vmatpush1.bf16.msra.mxu0 0
        %729 = vmatprep.subr.bf16.mxu0 0
        %730 = vmatpush1.bf16.msra.mxu0 0
        %731 = vmatprep.mubr.bf16.mxu0 0
        %732 = vmatmul.mubr.bf16.gmra.mrb[0].mxu0 %v652
        %v733 = vpop.f32.mrb[0].mxu0
        %v734 = vadd.f32 %v624, %v733
        %v735 = vpop.f32.mrb[0].mxu0
        %v736 = vpop.f32.mrb[0].mxu0
        %v737 = vadd.f32 %v624, %v736
        %v738 = vpop.f32.mrb[0].mxu0
        %739 = vmatprep.mubr.bf16.mxu0 0
        %740 = vmatmul.mubr.bf16.gmra.mrb[0].mxu0 %v655
        %v741 = vpop.f32.mrb[0].mxu0
        %v742 = vadd.f32 %v624, %v741
        %v743 = vpop.f32.mrb[0].mxu0
        %v744 = vpop.f32.mrb[0].mxu0
        %v745 = vadd.f32 %v624, %v744
        %v746 = vpop.f32.mrb[0].mxu0
        %747 = vmatprep.mubr.bf16.mxu0 0
        %748 = vmatmul.mubr.bf16.gmra.mrb[0].mxu0 %v658
        %v749 = vpop.f32.mrb[0].mxu0
        %v750 = vadd.f32 %v624, %v749
        %v751 = vpop.f32.mrb[0].mxu0
        %v752 = vpop.f32.mrb[0].mxu0
        %v753 = vadd.f32 %v624, %v752
        %v754 = vpop.f32.mrb[0].mxu0
        %755 = vmatprep.mubr.bf16.mxu0 0
        %756 = vmatmul.mubr.bf16.gmra.mrb[0].mxu0 %v661
        %v757 = vpop.f32.mrb[0].mxu0
        %v758 = vadd.f32 %v624, %v757
        %v759 = vpop.f32.mrb[0].mxu0
        %v760 = vpop.f32.mrb[0].mxu0
        %v761 = vadd.f32 %v624, %v760
        %v762 = vpop.f32.mrb[0].mxu0
        %763 = vmatprep.mubr.bf16.mxu0 0
        %764 = vmatmul.mubr.bf16.gmra.mrb[0].mxu0 %v664
        %v765 = vpop.f32.mrb[0].mxu0
        %v766 = vadd.f32 %v624, %v765
        %v767 = vpop.f32.mrb[0].mxu0
        %v768 = vpop.f32.mrb[0].mxu0
        %v769 = vadd.f32 %v624, %v768
        %v770 = vpop.f32.mrb[0].mxu0
        %771 = vmatprep.mubr.bf16.mxu0 0
        %772 = vmatmul.mubr.bf16.gmra.mrb[0].mxu0 %v667
        %v773 = vpop.f32.mrb[0].mxu0
        %v774 = vadd.f32 %v624, %v773
        %v775 = vpop.f32.mrb[0].mxu0
        %v776 = vpop.f32.mrb[0].mxu0
        %v777 = vadd.f32 %v624, %v776
        %v778 = vpop.f32.mrb[0].mxu0
        %779 = vmatprep.mubr.bf16.mxu0 0
        %780 = vmatmul.mubr.bf16.gmra.mrb[0].mxu0 %v670
        %v781 = vpop.f32.mrb[0].mxu0
        %v782 = vadd.f32 %v624, %v781
        %v783 = vpop.f32.mrb[0].mxu0
        %v784 = vpop.f32.mrb[0].mxu0
        %v785 = vadd.f32 %v624, %v784
        %v786 = vpop.f32.mrb[0].mxu0
        %787 = vmatprep.mubr.bf16.mxu0 0
        %788 = vmatmul.mubr.bf16.gmra.mrb[0].mxu0 %v673
        %v789 = vpop.f32.mrb[0].mxu0
        %v790 = vadd.f32 %v624, %v789
        %v791 = vpop.f32.mrb[0].mxu0
        %v792 = vpop.f32.mrb[0].mxu0
        %v793 = vadd.f32 %v624, %v792
        %v794 = vpop.f32.mrb[0].mxu0
        %795 = vmatprep.mubr.bf16.mxu0 0
        %796 = vmatmul.mubr.bf16.gmra.mrb[0].mxu0 %v676
        %v797 = vpop.f32.mrb[0].mxu0
        %v798 = vadd.f32 %v624, %v797
        %v799 = vpop.f32.mrb[0].mxu0
        %v800 = vpop.f32.mrb[0].mxu0
        %v801 = vadd.f32 %v624, %v800
        %v802 = vpop.f32.mrb[0].mxu0
        %803 = vmatprep.mubr.bf16.mxu0 0
        %804 = vmatmul.mubr.bf16.gmra.mrb[0].mxu0 %v679
        %v805 = vpop.f32.mrb[0].mxu0
        %v806 = vadd.f32 %v624, %v805
        %v807 = vpop.f32.mrb[0].mxu0
        %v808 = vpop.f32.mrb[0].mxu0
        %v809 = vadd.f32 %v624, %v808
        %v810 = vpop.f32.mrb[0].mxu0
        %811 = vmatprep.mubr.bf16.mxu0 0
        %812 = vmatmul.mubr.bf16.gmra.mrb[0].mxu0 %v682
        %v813 = vpop.f32.mrb[0].mxu0
        %v814 = vadd.f32 %v624, %v813
        %v815 = vpop.f32.mrb[0].mxu0
        %v816 = vpop.f32.mrb[0].mxu0
        %v817 = vadd.f32 %v624, %v816
        %v818 = vpop.f32.mrb[0].mxu0
        %819 = vmatprep.mubr.bf16.mxu0 0
        %820 = vmatmul.mubr.bf16.gmra.mrb[0].mxu0 %v685
        %v821 = vpop.f32.mrb[0].mxu0
        %v822 = vadd.f32 %v624, %v821
        %v823 = vpop.f32.mrb[0].mxu0
        %v824 = vpop.f32.mrb[0].mxu0
        %v825 = vadd.f32 %v624, %v824
        %v826 = vpop.f32.mrb[0].mxu0
        %827 = vmatprep.mubr.bf16.mxu0 0
        %828 = vmatmul.mubr.bf16.gmra.mrb[0].mxu0 %v688
        %v829 = vpop.f32.mrb[0].mxu0
        %v830 = vadd.f32 %v624, %v829
        %v831 = vpop.f32.mrb[0].mxu0
        %v832 = vpop.f32.mrb[0].mxu0
        %v833 = vadd.f32 %v624, %v832
        %v834 = vpop.f32.mrb[0].mxu0
        %835 = vmatprep.mubr.bf16.mxu0 0
        %836 = vmatmul.mubr.bf16.gmra.mrb[0].mxu0 %v691
        %v837 = vpop.f32.mrb[0].mxu0
        %v838 = vadd.f32 %v624, %v837
        %v839 = vpop.f32.mrb[0].mxu0
        %v840 = vpop.f32.mrb[0].mxu0
        %v841 = vadd.f32 %v624, %v840
        %v842 = vpop.f32.mrb[0].mxu0
        %843 = vmatprep.mubr.bf16.mxu0 0
        %844 = vmatmul.mubr.bf16.gmra.mrb[0].mxu0 %v694
        %v845 = vpop.f32.mrb[0].mxu0
        %v846 = vadd.f32 %v624, %v845
        %v847 = vpop.f32.mrb[0].mxu0
        %v848 = vpop.f32.mrb[0].mxu0
        %v849 = vadd.f32 %v624, %v848
        %v850 = vpop.f32.mrb[0].mxu0
        %851 = vmatprep.mubr.bf16.mxu0 0
        %852 = vmatmul.mubr.bf16.gmra.mrb[0].mxu0 %v697
        %v853 = vpop.f32.mrb[0].mxu0
        %v854 = vadd.f32 %v624, %v853
        %v855 = vpop.f32.mrb[0].mxu0
        %v856 = vpop.f32.mrb[0].mxu0
        %v857 = vadd.f32 %v624, %v856
        %v858 = vpop.f32.mrb[0].mxu0
        %859 = vdwg.mxu0
        %v860 = vmax.f32 %v734, 0.0
        %v861 = vmax.f32 %v737, 0.0
        %v862 = vmax.f32 %v742, 0.0
        %v863 = vmax.f32 %v745, 0.0
        %v864 = vmax.f32 %v750, 0.0
        %v865 = vmax.f32 %v753, 0.0
        %v866 = vmax.f32 %v758, 0.0
        %v867 = vmax.f32 %v761, 0.0
        %v868 = vmax.f32 %v766, 0.0
        %v869 = vmax.f32 %v769, 0.0
        %v870 = vmax.f32 %v774, 0.0
        %v871 = vmax.f32 %v777, 0.0
        %v872 = vmax.f32 %v782, 0.0
        %v873 = vmax.f32 %v785, 0.0
        %v874 = vmax.f32 %v790, 0.0
        %v875 = vmax.f32 %v793, 0.0
        %v876 = vmax.f32 %v798, 0.0
        %v877 = vmax.f32 %v801, 0.0
        %v878 = vmax.f32 %v806, 0.0
        %v879 = vmax.f32 %v809, 0.0
        %v880 = vmax.f32 %v814, 0.0
        %v881 = vmax.f32 %v817, 0.0
        %v882 = vmax.f32 %v822, 0.0
        %v883 = vmax.f32 %v825, 0.0
        %v884 = vmax.f32 %v830, 0.0
        %v885 = vmax.f32 %v833, 0.0
        %v886 = vmax.f32 %v838, 0.0
        %v887 = vmax.f32 %v841, 0.0
        %v888 = vmax.f32 %v846, 0.0
        %v889 = vmax.f32 %v849, 0.0
        %v890 = vmax.f32 %v854, 0.0
        %v891 = vmax.f32 %v857, 0.0
        %v892 = vld [vmem:[%s5] sm:$0x1]
        %v893 = vpack.c.bf16 %v861, %v860
        %v894 = vpack.c.bf16 %v863, %v862
        %v895 = vpack.c.bf16 %v865, %v864
        %v896 = vpack.c.bf16 %v867, %v866
        %v897 = vpack.c.bf16 %v869, %v868
        %v898 = vpack.c.bf16 %v871, %v870
        %v899 = vpack.c.bf16 %v873, %v872
        %v900 = vpack.c.bf16 %v875, %v874
        %v901 = vpack.c.bf16 %v877, %v876
        %v902 = vpack.c.bf16 %v879, %v878
        %v903 = vpack.c.bf16 %v881, %v880
        %v904 = vpack.c.bf16 %v883, %v882
        %v905 = vpack.c.bf16 %v885, %v884
        %v906 = vpack.c.bf16 %v887, %v886
        %v907 = vpack.c.bf16 %v889, %v888
        %v908 = vpack.c.bf16 %v891, %v890
        %s909 = sld [smem:[#allocation2]]
        %v910 = vstv %s909
        %v912 = vsel %vm353, %v892, 0
        %v915 = vsel %vm353, %v893, 0
        %v918 = vsel %vm353, %v894, 0
        %v921 = vsel %vm353, %v895, 0
        %v924 = vsel %vm353, %v896, 0
        %v927 = vsel %vm353, %v897, 0
        %v930 = vsel %vm353, %v898, 0
        %v933 = vsel %vm353, %v899, 0
        %v936 = vsel %vm353, %v900, 0
        %v939 = vsel %vm353, %v901, 0
        %v942 = vsel %vm353, %v902, 0
        %v945 = vsel %vm353, %v903, 0
        %v948 = vsel %vm353, %v904, 0
        %v951 = vsel %vm353, %v905, 0
        %v954 = vsel %vm353, %v906, 0
        %v957 = vsel %vm353, %v907, 0
        %v960 = vsel %vm353, %v908, 0
        %962 = vmatprep.subr.bf16.mxu0 0
        %963 = vmatpush1.bf16.xpose.msra.mxu0 %v915
        %964 = vmatprep.subr.bf16.mxu0 0
        %965 = vmatpush1.bf16.xpose.msra.mxu0 %v918
        %966 = vmatprep.subr.bf16.mxu0 0
        %967 = vmatpush1.bf16.xpose.msra.mxu0 %v921
        %968 = vmatprep.subr.bf16.mxu0 0
        %969 = vmatpush1.bf16.xpose.msra.mxu0 %v924
        %970 = vmatprep.subr.bf16.mxu0 0
        %971 = vmatpush1.bf16.xpose.msra.mxu0 %v927
        %972 = vmatprep.subr.bf16.mxu0 0
        %973 = vmatpush1.bf16.xpose.msra.mxu0 %v930
        %974 = vmatprep.subr.bf16.mxu0 0
        %975 = vmatpush1.bf16.xpose.msra.mxu0 %v933
        %976 = vmatprep.subr.bf16.mxu0 0
        %977 = vmatpush1.bf16.xpose.msra.mxu0 %v936
        %978 = vmatprep.subr.bf16.mxu0 0
        %979 = vmatpush1.bf16.xpose.msra.mxu0 %v939
        %980 = vmatprep.subr.bf16.mxu0 0
        %981 = vmatpush1.bf16.xpose.msra.mxu0 %v942
        %982 = vmatprep.subr.bf16.mxu0 0
        %983 = vmatpush1.bf16.xpose.msra.mxu0 %v945
        %984 = vmatprep.subr.bf16.mxu0 0
        %985 = vmatpush1.bf16.xpose.msra.mxu0 %v948
        %986 = vmatprep.subr.bf16.mxu0 0
        %987 = vmatpush1.bf16.xpose.msra.mxu0 %v951
        %988 = vmatprep.subr.bf16.mxu0 0
        %989 = vmatpush1.bf16.xpose.msra.mxu0 %v954
        %990 = vmatprep.subr.bf16.mxu0 0
        %991 = vmatpush1.bf16.xpose.msra.mxu0 %v957
        %992 = vmatprep.subr.bf16.mxu0 0
        %993 = vmatpush1.bf16.xpose.msra.mxu0 %v960
        %994 = vmatprep.mubr.bf16.mxu0 0
        %995 = vmatmul.mubr.bf16.gmra.mrb[0].mxu0 %v912
        %v996 = vpop.f32.mrb[0].mxu0
        %v997 = vadd.f32 %v910, %v996
        %v998 = vpop.f32.mrb[0].mxu0
        %v999 = vadd.f32 %v910, %v998
        %v1000 = vpop.f32.mrb[0].mxu0
        %v1001 = vpop.f32.mrb[0].mxu0
        %1002 = vdwg.mxu0
        %v1003 = vxor.u32 %v997, 2147483648
        %v1004 = vxor.u32 %v999, 2147483648
        %v1005 = vmul.f32 %v1003, 1.442695
        %v1006 = vpow.pop %v1005
        %v1007 = vmul.f32 %v1004, 1.442695
        %v1008 = vpow.pop %v1007
        %v1009 = vadd.f32 %v1006, 1.0
        %v1010 = vadd.f32 %v1008, 1.0
        %v1011 = vrcp.pop %v1009
        %v1012 = vmul.f32 1.0, %v1011
        %v1013 = vrcp.pop %v1010
        %v1014 = vmul.f32 1.0, %v1013
        %v1017 = vcombine.low %v1012, %v1014
        %v1019 = vunpack.c.l.s4 1966171168
        %v1020 = vunpack.c.0.s8 %v1019
        %v1021 = vlaneseq
        %v1022 = vshrl.u32 %v1021, 7
        %v1023 = vsub.s32 %v1020, %v1022
        %v1024 = vrot.slane %v1017, %v1023
        %v1026 = vunpack.c.l.s4 1966171168
        %v1027 = vunpack.c.0.s8 %v1026
        %v1028 = vlaneseq
        %v1029 = vshrl.u32 %v1028, 7
        %v1030 = vsub.s32 %v1027, %v1029
        %v1031 = vrot.slane %v1024, %v1030
        %v1033 = vlaneseq
        %vm1034 = vcmp.ge.s32.totalorder %v1033, 0
        %vm1035 = vcmp.lt.s32.totalorder %v1033, 256
        %vm1036 = vmand %vm1034, %vm1035
        %1037 = vst.msk [vmem:[%s273] sm:$0x3] %vm1036, %v1031
        %s1038 = sand.u32 %s182, 1
        %s1039 = scalar_lea.sflag [#allocation4], %s1038
        %s1040 = sand.u32 %s182, 1
        %s1041 = smul.addr %s1040, 2
        %s1042 = scalar_lea.vmem [#allocation3], %s1041
        // Predicated region
        $region49: #{tpu_custom_call.1} parent=47 // pred_check
          %p1043 = pneg %p192
        $region50: #{tpu_custom_call.1} parent=47 // pred_check_branch
          %1045 = sbr.rel (%p1043) target = $region52
        $region51: #{tpu_custom_call.1} parent=47 // pred_region
          %s1046 = smul.u32 2, %s22
          %s1048 = ssub.s32 32, 32
          %1049 = vsyncadd %s1039, %s1048
          %s1050 = smul.addr %s1046, 16
          %s1051 = scalar_lea.hbm %s7, %s1050
          %s1053 = sshll.u32 %s1042, 4
          %s1054 = int_to_ptr.vmem [resolvable:$true] %s1053
          %1056 = dma.vmem_to_hbm [thread:$0]  %s1054, 32, %s1051, %s1039
        $region52: #{tpu_custom_call.1} parent=47 // pred_fallthru
          _
      $region48: #{tpu_custom_call.1} parent=5 // pred_fallthru
        _
      %p1057 = scmp.le.s32.totalorder 2, %s17
      // Predicated region
      $region53: #{tpu_custom_call.1} parent=5 // pred_check
        %p1058 = pneg %p1057
      $region54: #{tpu_custom_call.1} parent=5 // pred_check_branch
        %1060 = sbr.rel (%p1058) target = $region56
      $region55: #{tpu_custom_call.1} parent=5 // pred_region
        %s1061 = ssub.s32 %s17, 2
        // Predicated region
        $region57: #{tpu_custom_call.1} parent=55 // pred_check
          %p1062 = pneg %p198
        $region58: #{tpu_custom_call.1} parent=55 // pred_check_branch
          %1064 = sbr.rel (%p1062) target = $region60
        $region59: #{tpu_custom_call.1} parent=55 // pred_region
          %s1065 = sand.u32 %s183, 1
          %s1066 = scalar_lea.sflag [#allocation4], %s1065
          %s1067 = sand.u32 %s183, 1
          %s1068 = smul.addr %s1067, 2
          %s1069 = scalar_lea.vmem [#allocation3], %s1068
          %1070 = dma.done %s1066, 32
        $region60: #{tpu_custom_call.1} parent=55 // pred_fallthru
          _
      $region56: #{tpu_custom_call.1} parent=5 // pred_fallthru
        _
    $region6: #{tpu_custom_call.1} parent=1 // loop_footer
      %s21 = sadd.s32 1, %s17
    $region7: #{tpu_custom_call.1} parent=1 // loop_footer_branch
      %16 = sbr.rel target = $region3
    $region8: #{tpu_custom_call.1} parent=1 // loop_exit
      _
    %1071 = vsyncpa [#allocation4], 1
    %s1072 = scalar_lea.sflag [#allocation4], 1
    %1073 = vsyncpa %s1072, 1

</llo_original>
